<compile_context>
chip_gen: v6e
topology: v6e:2x2x1
jax: 0.10.0
libtpu: 0.0.40
codegen_flags: <defaults>
</compile_context>

<pallas_src>
import jax
import jax.numpy as jnp
from jax.experimental import pallas as pl
from jax.experimental.pallas import tpu as pltpu


def attn_topic_kernel(x_ref, v_ref, c_ref, w3_ref, b3_ref, w4_ref, b4_ref,
                      feat_ref, out_ref):
    f32 = jnp.float32

    # Upconvert the streamed bf16 x tile once; all elementwise softmax / weighted-sum math is
    # f32 VPU/XLU work (v5e has no bf16 VALU/EUP, and this keeps accumulation accurate).
    x = x_ref[...].astype(f32)                                  # (TB, N, D)

    # Fused attention score via VPU multiply + lane reduce (no width-1 MXU matmul, no reshape).
    # Dropout(p=0.5) follows the ReLU and is identity in eval mode.
    # TODO(synk): train-mode dropout (random mask on the attention score) not implemented.
    v = v_ref[...].astype(f32)                                  # (1, D) broadcast over lanes
    s = jnp.sum(x * v, axis=-1, keepdims=True)                  # (TB, N, 1)
    s = jnp.maximum(s + c_ref[...], 0.0)                        # fused bias + ReLU

    # Softmax over the region axis (PyTorch dim=1); exact divide (denominator is tiny).
    m = jnp.max(s, axis=1, keepdims=True)
    e = jnp.exp(s - m)
    alpha = e / jnp.sum(e, axis=1, keepdims=True)               # (TB, N, 1)

    # Attention-weighted region sum -> (TB, D); single bulk store.
    feat = jnp.sum(x * alpha, axis=1)
    feat_ref[...] = feat.astype(feat_ref.dtype)

    # topic_model: Linear(D->1024) -> ReLU -> Linear(1024->T); bf16 MXU, f32 accumulation.
    h = jnp.dot(feat.astype(w3_ref.dtype), w3_ref[...],
                preferred_element_type=f32) + b3_ref[...]
    h = jnp.maximum(h, 0.0)
    out = jnp.dot(h.astype(w4_ref.dtype), w4_ref[...],
                  preferred_element_type=f32) + b4_ref[...]
    out_ref[...] = out.astype(out_ref.dtype)


def _round_up(n, m):
    return ((n + m - 1) // m) * m


def _choose_batch_tiling(B, row_bytes, vmem_capacity):
    """Pick (TB, padded_B). TB is either == B (full-dim exemption) or a multiple of 8."""
    # Per-buffer x-tile budget ~ VMEM/20 (double-buffered bf16 tile + the in-kernel f32 upcast
    # and product intermediates must all fit), clamped to [2 MiB, 12 MiB] so v5e/v6e keep
    # multi-MiB DMAs and v7x (64 MiB physical VMEM) still fits comfortably.
    budget = min(max(vmem_capacity // 20, 2 << 20), 12 << 20)
    cap = max(8, (budget // max(row_bytes, 1)) // 8 * 8)
    cap = min(cap, 1024)
    if B >= 16:
        # Keep >= 2 grid steps so the "parallel" batch axis can shard over v7x's 2 TensorCores.
        cap = min(cap, max(8, (B // 2) // 8 * 8))
    if B <= 8:
        return B, B                                  # single whole-batch tile
    start = min(cap, (B // 8) * 8)
    for tb in range(start, 7, -8):
        if B % tb == 0:
            return tb, B                             # multiple of 8 that divides B: no padding
    if B <= cap:
        return B, B                                  # single whole-batch tile: no padding
    tb = cap
    return tb, ((B + tb - 1) // tb) * tb             # last resort: pad the batch


def attn_topic_model(x, params, *, interpret=False):
    B, N, D = x.shape
    w1, b1, w2, b2, w3, b3, w4, b4 = params
    H = w3.shape[1]
    T = w4.shape[1]
    f32, bf16 = jnp.float32, jnp.bfloat16

    # Exact algebraic fusion of the two attention linears (kept in f32; tiny).
    v = w1.astype(f32) @ w2.astype(f32)                         # (D, 1)
    c = b1.astype(f32) @ w2.astype(f32) + b2.astype(f32)        # (1, 1)
    v_row = v.reshape(1, D)                                     # lane-major row for VPU broadcast

    # bf16 activations / weights (f32 accumulation inside the kernel). In a full model the x cast
    # fuses into its producer; either way the kernel's HBM read of x is halved.
    x_in = x if x.dtype == bf16 else x.astype(bf16)
    w3_in = w3.astype(bf16)
    w4_in = w4.astype(bf16)
    b3_in = b3.astype(f32)
    b4_in = b4.astype(f32)

    # Lane-pad only the topic dimension so the `out` store is lane-dense (w4/b4 padding is tiny).
    Tp = _round_up(T, 128)
    if Tp != T:
        w4_in = jnp.pad(w4_in, ((0, 0), (0, Tp - T)))
        b4_in = jnp.pad(b4_in, ((0, 0), (0, Tp - T)))

    # Generation-aware batch tiling (VMEM capacity query; conservative v7x fallback).
    try:
        vmem_capacity = int(pltpu.get_tpu_info().vmem_capacity_bytes)
    except Exception:
        vmem_capacity = 64 << 20
    row_bytes = N * D * jnp.dtype(x_in.dtype).itemsize
    TB, Bp = _choose_batch_tiling(B, row_bytes, vmem_capacity)
    if Bp != B:
        x_in = jnp.pad(x_in, ((0, Bp - B), (0, 0), (0, 0)))     # padded rows sliced off below

    # Explicit scoped-VMEM limit: double-buffered x tile + f32 in-kernel intermediates
    # (upcast + one product) + weights (counted double for headroom) + outputs + margin.
    x_tile_bytes = TB * N * D * jnp.dtype(x_in.dtype).itemsize
    f32_tile_bytes = TB * N * D * 4
    w_bytes = ((v_row.size + c.size + b3_in.size + b4_in.size) * 4
               + (w3_in.size + w4_in.size) * 2)
    out_bytes = TB * (D + Tp) * 4
    vmem_limit = 2 * x_tile_bytes + 2 * f32_tile_bytes + 2 * w_bytes + 2 * out_bytes + (8 << 20)
    vmem_limit = min(max(vmem_limit, 32 << 20), int(vmem_capacity * 0.9))

    cost = pl.CostEstimate(
        flops=int(4 * Bp * N * D + 2 * Bp * (D * H + H * Tp)),
        transcendentals=int(Bp * N),
        bytes_accessed=int(Bp * N * D * jnp.dtype(x_in.dtype).itemsize
                           + w_bytes + Bp * (D + Tp) * 4),
    )

    resident = dict(pipeline_mode=pl.Buffered(1))   # constant-index weights: single VMEM buffer

    feat_p, out_p = pl.pallas_call(
        attn_topic_kernel,
        out_shape=(jax.ShapeDtypeStruct((Bp, D), f32),
                   jax.ShapeDtypeStruct((Bp, Tp), f32)),
        grid_spec=pltpu.PrefetchScalarGridSpec(
            num_scalar_prefetch=0,
            grid=(Bp // TB,),
            in_specs=[
                pl.BlockSpec((TB, N, D), lambda i: (i, 0, 0)),          # x: streamed over batch
                pl.BlockSpec((1, D), lambda i: (0, 0), **resident),     # fused attention vector
                pl.BlockSpec((1, 1), lambda i: (0, 0), **resident),     # fused attention bias
                pl.BlockSpec((D, H), lambda i: (0, 0), **resident),     # topic_model w3
                pl.BlockSpec((1, H), lambda i: (0, 0), **resident),     # topic_model b3
                pl.BlockSpec((H, Tp), lambda i: (0, 0), **resident),    # topic_model w4
                pl.BlockSpec((1, Tp), lambda i: (0, 0), **resident),    # topic_model b4
            ],
            out_specs=[
                pl.BlockSpec((TB, D), lambda i: (i, 0)),
                pl.BlockSpec((TB, Tp), lambda i: (i, 0)),
            ],
        ),
        compiler_params=pltpu.CompilerParams(
            dimension_semantics=("parallel",),       # batch tiles independent -> shard across TCs
            vmem_limit_bytes=int(vmem_limit)),
        cost_estimate=cost,
        interpret=interpret,
    )(x_in, v_row, c, w3_in, b3_in, w4_in, b4_in)

    feat = feat_p[:B].astype(x.dtype)
    out = out_p[:B, :T].astype(x.dtype)
    return feat, out


def init_params(key, input_dim, num_topics, hidden=1024):
    # PyTorch nn.Linear default init: U(-1/sqrt(fan_in), 1/sqrt(fan_in)); deterministic keys.
    ks = jax.random.split(key, 8)

    def lin(kw, kb, fan_in, fan_out):
        bound = 1.0 / (fan_in ** 0.5)
        w = jax.random.uniform(kw, (fan_in, fan_out), jnp.float32, -bound, bound)
        b = jax.random.uniform(kb, (1, fan_out), jnp.float32, -bound, bound)
        return w, b

    w1, b1 = lin(ks[0], ks[1], input_dim, hidden)      # attn Linear(D -> 1024)
    w2, b2 = lin(ks[2], ks[3], hidden, 1)              # attn Linear(1024 -> 1)
    w3, b3 = lin(ks[4], ks[5], input_dim, hidden)      # topic_model Linear(D -> 1024)
    w4, b4 = lin(ks[6], ks[7], hidden, num_topics)     # topic_model Linear(1024 -> T)
    return (w1, b1, w2, b2, w3, b3, w4, b4)


def reference(x, params):
    # Unfused pure-f32 JAX reference matching the PyTorch forward (eval mode).
    w1, b1, w2, b2, w3, b3, w4, b4 = params
    h1 = x @ w1 + b1                                   # (B, N, 1024)
    s = jnp.maximum(h1 @ w2 + b2, 0.0)                 # (B, N, 1)
    alpha = jax.nn.softmax(s, axis=1)
    feat = jnp.sum(x * alpha, axis=1)                  # (B, D)
    h2 = jnp.maximum(feat @ w3 + b3, 0.0)
    out = h2 @ w4 + b4                                 # (B, T)
    return feat, out


if __name__ == "__main__":
    B, N, D, T = 2, 8, 32, 16   # batch, regions, input_dim, num_topics (attention hidden = 1024)
    key = jax.random.PRNGKey(0)
    kx, kp = jax.random.split(key)
    x = jax.random.normal(kx, (B, N, D), dtype=jnp.float32)
    params = init_params(kp, D, T)

    feat, out = attn_topic_model(x, params)
    jax.block_until_ready((feat, out))

    feat_ref, out_ref = reference(x, params)
    assert feat.shape == (B, D) and out.shape == (B, T)
    # Tolerances reflect bf16 activations/weights (f32 accumulation) vs the pure-f32 reference.
    assert jnp.allclose(feat, feat_ref, atol=3e-2, rtol=3e-2)
    assert jnp.allclose(out, out_ref, atol=3e-2, rtol=3e-2)
    print("KERNEL_OK")
</pallas_src>

<mosaic_0001>
module attributes {stable_mosaic.version = 11 : i64} {
  func.func @attn_topic_kernel(%arg0: i32, %arg1: memref<2x8x32xbf16, #tpu.memory_space<vmem>>, %arg2: memref<1x32xf32, #tpu.memory_space<vmem>>, %arg3: memref<1x1xf32, #tpu.memory_space<vmem>>, %arg4: memref<32x1024xbf16, #tpu.memory_space<vmem>>, %arg5: memref<1x1024xf32, #tpu.memory_space<vmem>>, %arg6: memref<1024x128xbf16, #tpu.memory_space<vmem>>, %arg7: memref<1x128xf32, #tpu.memory_space<vmem>>, %arg8: memref<2x32xf32, #tpu.memory_space<vmem>>, %arg9: memref<2x128xf32, #tpu.memory_space<vmem>>) attributes {dimension_semantics = [#tpu.dimension_semantics<parallel>], iteration_bounds = array<i64: 1>, scalar_prefetch = 0 : i64, scratch_operands = 0 : i64, tpu.core_type = #tpu.core_type<tc>, window_params = [{transform_indices = @transform_0, window_bounds = array<i64: 2, 8, 32>}, {pipeline_mode = #tpu.pipeline_mode<synchronous>, transform_indices = @transform_1, window_bounds = array<i64: 1, 32>}, {pipeline_mode = #tpu.pipeline_mode<synchronous>, transform_indices = @transform_2, window_bounds = array<i64: 1, 1>}, {pipeline_mode = #tpu.pipeline_mode<synchronous>, transform_indices = @transform_3, window_bounds = array<i64: 32, 1024>}, {pipeline_mode = #tpu.pipeline_mode<synchronous>, transform_indices = @transform_4, window_bounds = array<i64: 1, 1024>}, {pipeline_mode = #tpu.pipeline_mode<synchronous>, transform_indices = @transform_5, window_bounds = array<i64: 1024, 128>}, {pipeline_mode = #tpu.pipeline_mode<synchronous>, transform_indices = @transform_6, window_bounds = array<i64: 1, 128>}, {transform_indices = @transform_7, window_bounds = array<i64: 2, 32>}, {transform_indices = @transform_8, window_bounds = array<i64: 2, 128>}]} {
    %c0 = arith.constant 0 : index
    %c0_0 = arith.constant 0 : index
    %c0_1 = arith.constant 0 : index
    %0 = vector.load %arg1[%c0, %c0_0, %c0_1] : memref<2x8x32xbf16, #tpu.memory_space<vmem>>, vector<2x8x32xbf16>
    %1 = arith.extf %0 : vector<2x8x32xbf16> to vector<2x8x32xf32>
    %c0_2 = arith.constant 0 : index
    %c0_3 = arith.constant 0 : index
    %2 = vector.load %arg2[%c0_2, %c0_3] : memref<1x32xf32, #tpu.memory_space<vmem>>, vector<1x32xf32>
    %3 = vector.shape_cast %2 : vector<1x32xf32> to vector<1x1x32xf32>
    %4 = vector.broadcast %3 : vector<1x1x32xf32> to vector<2x8x32xf32>
    %5 = arith.mulf %1, %4 : vector<2x8x32xf32>
    %cst = arith.constant dense<0.000000e+00> : vector<2x8xf32>
    %6 = vector.multi_reduction <add>, %5, %cst [2] : vector<2x8x32xf32> to vector<2x8xf32>
    %7 = vector.shape_cast %6 : vector<2x8xf32> to vector<2x8x1xf32>
    %c0_4 = arith.constant 0 : index
    %c0_5 = arith.constant 0 : index
    %8 = vector.load %arg3[%c0_4, %c0_5] : memref<1x1xf32, #tpu.memory_space<vmem>>, vector<1x1xf32>
    %9 = vector.shape_cast %8 : vector<1x1xf32> to vector<1x1x1xf32>
    %10 = vector.broadcast %9 : vector<1x1x1xf32> to vector<2x8x1xf32>
    %11 = arith.addf %7, %10 : vector<2x8x1xf32>
    %cst_6 = arith.constant 0.000000e+00 : f32
    %12 = vector.broadcast %cst_6 : f32 to vector<2x8x1xf32>
    %13 = arith.maximumf %11, %12 : vector<2x8x1xf32>
    %cst_7 = arith.constant dense<0xFF800000> : vector<2x1xf32>
    %14 = vector.multi_reduction <maximumf>, %13, %cst_7 [1] : vector<2x8x1xf32> to vector<2x1xf32>
    %15 = vector.shape_cast %14 : vector<2x1xf32> to vector<2x1x1xf32>
    %16 = vector.broadcast %15 : vector<2x1x1xf32> to vector<2x8x1xf32>
    %17 = arith.subf %13, %16 : vector<2x8x1xf32>
    %18 = math.exp %17 : vector<2x8x1xf32>
    %cst_8 = arith.constant dense<0.000000e+00> : vector<2x1xf32>
    %19 = vector.multi_reduction <add>, %18, %cst_8 [1] : vector<2x8x1xf32> to vector<2x1xf32>
    %20 = vector.shape_cast %19 : vector<2x1xf32> to vector<2x1x1xf32>
    %21 = vector.broadcast %20 : vector<2x1x1xf32> to vector<2x8x1xf32>
    %22 = arith.divf %18, %21 : vector<2x8x1xf32>
    %23 = vector.broadcast %22 : vector<2x8x1xf32> to vector<2x8x32xf32>
    %24 = arith.mulf %1, %23 : vector<2x8x32xf32>
    %cst_9 = arith.constant dense<0.000000e+00> : vector<2x32xf32>
    %25 = vector.multi_reduction <add>, %24, %cst_9 [1] : vector<2x8x32xf32> to vector<2x32xf32>
    %c0_10 = arith.constant 0 : index
    %c0_11 = arith.constant 0 : index
    %26 = vector.load %arg8[%c0_10, %c0_11] : memref<2x32xf32, #tpu.memory_space<vmem>>, vector<2x32xf32>
    tpu.vector_store %arg8[%c0_10, %c0_11], %25 {strides = array<i32>} : memref<2x32xf32, #tpu.memory_space<vmem>>, vector<2x32xf32>,
    %27 = arith.truncf %25 : vector<2x32xf32> to vector<2x32xbf16>
    %c0_12 = arith.constant 0 : index
    %c0_13 = arith.constant 0 : index
    %28 = vector.load %arg4[%c0_12, %c0_13] : memref<32x1024xbf16, #tpu.memory_space<vmem>>, vector<32x1024xbf16>
    %cst_14 = arith.constant dense<0.000000e+00> : vector<2x1024xf32>
    %29 = tpu.matmul %27, %28, %cst_14 {dimension_numbers = #tpu.dot_dimension_numbers<[1], [0], [0], [1], [0, 0, 1, 1], [], []>} : vector<2x32xbf16>, vector<32x1024xbf16>, vector<2x1024xf32> -> vector<2x1024xf32>
    %c0_15 = arith.constant 0 : index
    %c0_16 = arith.constant 0 : index
    %30 = vector.load %arg5[%c0_15, %c0_16] : memref<1x1024xf32, #tpu.memory_space<vmem>>, vector<1x1024xf32>
    %31 = vector.broadcast %30 : vector<1x1024xf32> to vector<2x1024xf32>
    %32 = arith.addf %29, %31 : vector<2x1024xf32>
    %cst_17 = arith.constant 0.000000e+00 : f32
    %33 = vector.broadcast %cst_17 : f32 to vector<2x1024xf32>
    %34 = arith.maximumf %32, %33 : vector<2x1024xf32>
    %35 = arith.truncf %34 : vector<2x1024xf32> to vector<2x1024xbf16>
    %c0_18 = arith.constant 0 : index
    %c0_19 = arith.constant 0 : index
    %36 = vector.load %arg6[%c0_18, %c0_19] : memref<1024x128xbf16, #tpu.memory_space<vmem>>, vector<1024x128xbf16>
    %cst_20 = arith.constant dense<0.000000e+00> : vector<2x128xf32>
    %37 = tpu.matmul %35, %36, %cst_20 {dimension_numbers = #tpu.dot_dimension_numbers<[1], [0], [0], [1], [0, 0, 1, 1], [], []>} : vector<2x1024xbf16>, vector<1024x128xbf16>, vector<2x128xf32> -> vector<2x128xf32>
    %c0_21 = arith.constant 0 : index
    %c0_22 = arith.constant 0 : index
    %38 = vector.load %arg7[%c0_21, %c0_22] : memref<1x128xf32, #tpu.memory_space<vmem>>, vector<1x128xf32>
    %39 = vector.broadcast %38 : vector<1x128xf32> to vector<2x128xf32>
    %40 = arith.addf %37, %39 : vector<2x128xf32>
    %c0_23 = arith.constant 0 : index
    %c0_24 = arith.constant 0 : index
    %41 = vector.load %arg9[%c0_23, %c0_24] : memref<2x128xf32, #tpu.memory_space<vmem>>, vector<2x128xf32>
    tpu.vector_store %arg9[%c0_23, %c0_24], %40 {strides = array<i32>} : memref<2x128xf32, #tpu.memory_space<vmem>>, vector<2x128xf32>,
    return
  }
  func.func @transform_0(%arg0: i32) -> (i32, i32, i32) {
    %c0_i32 = arith.constant 0 : i32
    %c0_i32_0 = arith.constant 0 : i32
    %c0_i32_1 = arith.constant 0 : i32
    return %arg0, %c0_i32, %c0_i32_0 : i32, i32, i32
  }
  func.func @transform_1(%arg0: i32) -> (i32, i32) {
    %c0_i32 = arith.constant 0 : i32
    %c0_i32_0 = arith.constant 0 : i32
    %c0_i32_1 = arith.constant 0 : i32
    return %c0_i32, %c0_i32_0 : i32, i32
  }
  func.func @transform_2(%arg0: i32) -> (i32, i32) {
    %c0_i32 = arith.constant 0 : i32
    %c0_i32_0 = arith.constant 0 : i32
    %c0_i32_1 = arith.constant 0 : i32
    return %c0_i32, %c0_i32_0 : i32, i32
  }
  func.func @transform_3(%arg0: i32) -> (i32, i32) {
    %c0_i32 = arith.constant 0 : i32
    %c0_i32_0 = arith.constant 0 : i32
    %c0_i32_1 = arith.constant 0 : i32
    return %c0_i32, %c0_i32_0 : i32, i32
  }
  func.func @transform_4(%arg0: i32) -> (i32, i32) {
    %c0_i32 = arith.constant 0 : i32
    %c0_i32_0 = arith.constant 0 : i32
    %c0_i32_1 = arith.constant 0 : i32
    return %c0_i32, %c0_i32_0 : i32, i32
  }
  func.func @transform_5(%arg0: i32) -> (i32, i32) {
    %c0_i32 = arith.constant 0 : i32
    %c0_i32_0 = arith.constant 0 : i32
    %c0_i32_1 = arith.constant 0 : i32
    return %c0_i32, %c0_i32_0 : i32, i32
  }
  func.func @transform_6(%arg0: i32) -> (i32, i32) {
    %c0_i32 = arith.constant 0 : i32
    %c0_i32_0 = arith.constant 0 : i32
    %c0_i32_1 = arith.constant 0 : i32
    return %c0_i32, %c0_i32_0 : i32, i32
  }
  func.func @transform_7(%arg0: i32) -> (i32, i32) {
    %c0_i32 = arith.constant 0 : i32
    %c0_i32_0 = arith.constant 0 : i32
    return %arg0, %c0_i32 : i32, i32
  }
  func.func @transform_8(%arg0: i32) -> (i32, i32) {
    %c0_i32 = arith.constant 0 : i32
    %c0_i32_0 = arith.constant 0 : i32
    return %arg0, %c0_i32 : i32, i32
  }
}

</mosaic_0001>

<llo_original>
// kernel: tpu_custom_call.1
$region0: #{tpu_custom_call.1}
  #allocation0 [shape = 'u32[]', space=smem, size = 0x4, offset = 0x4, fixed_abs, tag = 'smem constant byte address 0x4 - core index']
  #allocation1 [shape = 'u32[144,128]{1,0:T(1,128)}', space=vmem, size = 0x12000, scoped, tag = 'internal scratch']
  #allocation2 [shape = 'f32[1,1]{1,0:T(1,128)S(1)}', space=vmem, size = 0x200, scoped, tag = 'scoped memory for tpu_custom_call.1']
  %s0 = inlined_call_operand.hbm [shape: bf16[2,8,32], index: 0, kind: input, shape index: {}]
  %s1 = inlined_call_operand.vmem [shape: f32[1,32], index: 1, kind: input, shape index: {}]
  %s2 = inlined_call_operand.<no memory space> [shape: f32[1,1], index: 2, kind: input, shape index: {}]
  %s3 = inlined_call_operand.hbm [shape: bf16[32,1024], index: 3, kind: input, shape index: {}]
  %s4 = inlined_call_operand.hbm [shape: f32[1,1024], index: 4, kind: input, shape index: {}]
  %s5 = inlined_call_operand.hbm [shape: bf16[1024,128], index: 5, kind: input, shape index: {}]
  %s6 = inlined_call_operand.vmem [shape: f32[1,128], index: 6, kind: input, shape index: {}]
  %s7 = inlined_call_operand.hbm [shape: f32[2,32], index: 7, kind: output, shape index: {0}]
  %s8 = inlined_call_operand.hbm [shape: f32[2,128], index: 8, kind: output, shape index: {1}]
  %9 = xla_tuple %s7, %s8
  %s10 = sld [smem:[#allocation0]]
  $region62: #{tpu_custom_call.1} parent=0
    _
  %s12 = ssub.s32 1, %s10
  %s13 = scalar_select 0, %s12, %s10
  %v14 = vstv %s2
  %15 = vst [vmem:[#allocation2] sm:$0x1] %v14
  $region1: #{tpu_custom_call.1} parent=0
    #allocation3 [shape = 'u8[4096]{0}', space=vmem, size = 0x1000, scoped, tag = 'input window, operand 0, single buffered']
    #allocation4 [shape = 's32[1]{0}', space=sflag, size = 0x4, scoped, tag = 'scoped memory for tpu_custom_call.1']
    #allocation5 [shape = 's32[1]{0}', space=sflag, size = 0x4, scoped, tag = 'scoped memory for tpu_custom_call.1']
    #allocation6 [shape = 'u8[65536]{0}', space=vmem, size = 0x10000, scoped, tag = 'input window, operand 3, single buffered']
    #allocation7 [shape = 's32[1]{0}', space=sflag, size = 0x4, scoped, tag = 'scoped memory for tpu_custom_call.1']
    #allocation8 [shape = 'u8[4096]{0}', space=vmem, size = 0x1000, scoped, tag = 'input window, operand 4, single buffered']
    #allocation9 [shape = 'u8[262144]{0}', space=vmem, size = 0x40000, scoped, tag = 'input window, operand 5, single buffered']
    #allocation10 [shape = 's32[1]{0}', space=sflag, size = 0x4, scoped, tag = 'scoped memory for tpu_custom_call.1']
    #allocation11 [shape = 'u8[1024]{0}', space=vmem, size = 0x400, scoped, tag = 'output window, operand 0, single buffered']
    #allocation12 [shape = 'u8[1024]{0}', space=vmem, size = 0x400, scoped, tag = 'output window, operand 1, single buffered']
    #allocation13 [shape = 's32[1]{0}', space=sflag, size = 0x4, scoped, tag = 'scoped memory for tpu_custom_call.1']
    %16 = vsyncpa [#allocation4], 0
    %17 = vsyncpa [#allocation7], 0
    %18 = vsyncpa [#allocation10], 0
    %19 = vsyncpa [#allocation5], 0
    %20 = vsyncpa [#allocation13], 0
    // Predicated region
    $region2: #{tpu_custom_call.1} parent=1 // pred_check
      _
    $region3: #{tpu_custom_call.1} parent=1 // pred_check_branch
      %22 = sbr.rel (0) target = $region5
    $region4: #{tpu_custom_call.1} parent=1 // pred_region
      %s24 = ssub.s32 128, 128
      %25 = vsyncadd [#allocation4], %s24
      %s26 = sshll.u32 [#allocation3], 4
      %s27 = int_to_ptr.vmem [resolvable:$true] %s26
      %32 = dma.hbm_to_vmem [thread:$0]  %s0, 128, %s27, [#allocation4], 64, 64, 4
    $region5: #{tpu_custom_call.1} parent=1 // pred_fallthru
      _
    // Predicated region
    $region6: #{tpu_custom_call.1} parent=1 // pred_check
      _
    $region7: #{tpu_custom_call.1} parent=1 // pred_check_branch
      %34 = sbr.rel (0) target = $region9
    $region8: #{tpu_custom_call.1} parent=1 // pred_region
      _
    $region9: #{tpu_custom_call.1} parent=1 // pred_fallthru
      _
    // Predicated region
    $region10: #{tpu_custom_call.1} parent=1 // pred_check
      _
    $region11: #{tpu_custom_call.1} parent=1 // pred_check_branch
      %36 = sbr.rel (0) target = $region13
    $region12: #{tpu_custom_call.1} parent=1 // pred_region
      _
    $region13: #{tpu_custom_call.1} parent=1 // pred_fallthru
      _
    // Predicated region
    $region14: #{tpu_custom_call.1} parent=1 // pred_check
      _
    $region15: #{tpu_custom_call.1} parent=1 // pred_check_branch
      %38 = sbr.rel (0) target = $region17
    $region16: #{tpu_custom_call.1} parent=1 // pred_region
      %s40 = ssub.s32 2048, 2048
      %41 = vsyncadd [#allocation7], %s40
      %s42 = sshll.u32 [#allocation6], 4
      %s43 = int_to_ptr.vmem [resolvable:$true] %s42
      %48 = dma.hbm_to_vmem [thread:$0]  %s3, 2048, %s43, [#allocation7], 512, 512, 32
    $region17: #{tpu_custom_call.1} parent=1 // pred_fallthru
      _
    // Predicated region
    $region18: #{tpu_custom_call.1} parent=1 // pred_check
      _
    $region19: #{tpu_custom_call.1} parent=1 // pred_check_branch
      %50 = sbr.rel (0) target = $region21
    $region20: #{tpu_custom_call.1} parent=1 // pred_region
      %s52 = ssub.s32 128, 128
      %53 = vsyncadd [#allocation7], %s52
      %s55 = sshll.u32 [#allocation8], 4
      %s56 = int_to_ptr.vmem [resolvable:$true] %s55
      %58 = dma.hbm_to_vmem [thread:$0]  %s4, 128, %s56, [#allocation7]
    $region21: #{tpu_custom_call.1} parent=1 // pred_fallthru
      _
    // Predicated region
    $region22: #{tpu_custom_call.1} parent=1 // pred_check
      _
    $region23: #{tpu_custom_call.1} parent=1 // pred_check_branch
      %60 = sbr.rel (0) target = $region25
    $region24: #{tpu_custom_call.1} parent=1 // pred_region
      %s62 = ssub.s32 8192, 8192
      %63 = vsyncadd [#allocation10], %s62
      %s64 = sshll.u32 [#allocation9], 4
      %s65 = int_to_ptr.vmem [resolvable:$true] %s64
      %70 = dma.hbm_to_vmem [thread:$0]  %s5, 8192, %s65, [#allocation10], 64, 64, 4
    $region25: #{tpu_custom_call.1} parent=1 // pred_fallthru
      _
    // Predicated region
    $region26: #{tpu_custom_call.1} parent=1 // pred_check
      _
    $region27: #{tpu_custom_call.1} parent=1 // pred_check_branch
      %72 = sbr.rel (0) target = $region29
    $region28: #{tpu_custom_call.1} parent=1 // pred_region
      _
    $region29: #{tpu_custom_call.1} parent=1 // pred_fallthru
      _
    // Predicated region
    $region30: #{tpu_custom_call.1} parent=1 // pred_check
      _
    $region31: #{tpu_custom_call.1} parent=1 // pred_check_branch
      %74 = sbr.rel (0) target = $region33
    $region32: #{tpu_custom_call.1} parent=1 // pred_region
      %75 = dma.done [#allocation4], 128
    $region33: #{tpu_custom_call.1} parent=1 // pred_fallthru
      _
    // Predicated region
    $region34: #{tpu_custom_call.1} parent=1 // pred_check
      _
    $region35: #{tpu_custom_call.1} parent=1 // pred_check_branch
      %77 = sbr.rel (0) target = $region37
    $region36: #{tpu_custom_call.1} parent=1 // pred_region
      %78 = dma.done [#allocation7], 2048
    $region37: #{tpu_custom_call.1} parent=1 // pred_fallthru
      _
    // Predicated region
    $region38: #{tpu_custom_call.1} parent=1 // pred_check
      _
    $region39: #{tpu_custom_call.1} parent=1 // pred_check_branch
      %80 = sbr.rel (0) target = $region41
    $region40: #{tpu_custom_call.1} parent=1 // pred_region
      %81 = dma.done [#allocation7], 128
    $region41: #{tpu_custom_call.1} parent=1 // pred_fallthru
      _
    // Predicated region
    $region42: #{tpu_custom_call.1} parent=1 // pred_check
      _
    $region43: #{tpu_custom_call.1} parent=1 // pred_check_branch
      %83 = sbr.rel (0) target = $region45
    $region44: #{tpu_custom_call.1} parent=1 // pred_region
      %84 = dma.done [#allocation10], 8192
    $region45: #{tpu_custom_call.1} parent=1 // pred_fallthru
      _
    %v86 = vld [vmem:[#allocation3] sm:$0xf]
    %v87 = vld [vmem:[#allocation3 + $0x4] sm:$0xf]
    %v88 = vunpack.c.l.bf16 %v86
    %v89 = vunpack.c.l.bf16 %v87
    %v90 = vld [vmem:[%s1] sm:$0x1]
    %v92 = vlaneseq
    %v93 = vshrl.u32 %v92, 7
    %v94 = vsub.s32 0, %v93
    %v95 = vrot.slane %v90, %v94
    %v97 = vmul.f32 %v88, %v95
    %v98 = vmul.f32 %v89, %v95
    %vm99 = vcmask 261120
    %v100 = vsel %vm99, %v97, 0.0
    %101 = vadd.xlane.f32.xlu0 %v100
    %v102 = vpop.xlane.xlu0 %101
    %v103 = vsel %vm99, %v98, 0.0
    %104 = vadd.xlane.f32.xlu0 %v103
    %v105 = vpop.xlane.xlu0 %104
    %v106 = vld [vmem:[#allocation2] sm:$0x1]
    %v108 = vlaneseq
    %v109 = vshrl.u32 %v108, 7
    %v110 = vsub.s32 0, %v109
    %v111 = vrot.slane %v106, %v110
    %v113 = vadd.f32 %v102, %v111
    %v114 = vadd.f32 %v105, %v111
    %v115 = vmax.f32 %v113, 0.0
    %v116 = vmax.f32 %v114, 0.0
    %vm117 = vcmask 7168
    %v118 = vsel %vm117, %v115, -inf
    %v119 = vrot.slane %v118, 4
    %v120 = vmax.f32 %v118, %v119
    %v121 = vrot.slane %v120, 2
    %v122 = vmax.f32 %v120, %v121
    %v123 = vrot.slane %v122, 1
    %v124 = vmax.f32 %v122, %v123
    %v125 = vsel %vm117, %v116, -inf
    %v126 = vrot.slane %v125, 4
    %v127 = vmax.f32 %v125, %v126
    %v128 = vrot.slane %v127, 2
    %v129 = vmax.f32 %v127, %v128
    %v130 = vrot.slane %v129, 1
    %v131 = vmax.f32 %v129, %v130
    %v132 = vsub.f32 %v115, %v124
    %v133 = vsub.f32 %v116, %v131
    %v134 = vmul.f32 %v132, 1.442695
    %v135 = vpow.pop %v134
    %v136 = vmul.f32 %v133, 1.442695
    %v137 = vpow.pop %v136
    %v138 = vsel %vm117, %v135, 0.0
    %v139 = vrot.slane %v138, 4
    %v140 = vadd.f32 %v138, %v139
    %v141 = vrot.slane %v140, 2
    %v142 = vadd.f32 %v140, %v141
    %v143 = vrot.slane %v142, 1
    %v144 = vadd.f32 %v142, %v143
    %v145 = vsel %vm117, %v137, 0.0
    %v146 = vrot.slane %v145, 4
    %v147 = vadd.f32 %v145, %v146
    %v148 = vrot.slane %v147, 2
    %v149 = vadd.f32 %v147, %v148
    %v150 = vrot.slane %v149, 1
    %v151 = vadd.f32 %v149, %v150
    %v152 = vrcp.pop %v144
    %v153 = vmul.f32 %v135, %v152
    %v154 = vrcp.pop %v151
    %v155 = vmul.f32 %v137, %v154
    %157 = vset.pattern.permute.xlu0 0
    %158 = vperm.xlu0 %157, %v153
    %v159 = vpop.permute.xlu0 %158
    %162 = vset.pattern.permute.xlu0 0
    %163 = vperm.xlu0 %162, %v155
    %v164 = vpop.permute.xlu0 %163
    %v166 = vmul.f32 %v88, %v159
    %v167 = vmul.f32 %v89, %v164
    %v168 = vsel %vm99, %v166, 0.0
    %v169 = vrot.slane %v168, 4
    %v170 = vadd.f32 %v168, %v169
    %v171 = vrot.slane %v170, 2
    %v172 = vadd.f32 %v170, %v171
    %v173 = vrot.slane %v172, 1
    %v174 = vadd.f32 %v172, %v173
    %v175 = vsel %vm99, %v167, 0.0
    %v176 = vrot.slane %v175, 4
    %v177 = vadd.f32 %v175, %v176
    %v178 = vrot.slane %v177, 2
    %v179 = vadd.f32 %v177, %v178
    %v180 = vrot.slane %v179, 1
    %v181 = vadd.f32 %v179, %v180
    %vm184 = vcmask 1041409
    %v185 = vsel %vm184, %v181, %v174
    %vm187 = vcmask 254976
    %188 = vst.msk [vmem:[#allocation11] sm:$0x3] %vm187, %v185
    %v189 = vpack.c.bf16 %v174, %v174
    %v190 = vpack.c.bf16 %v181, %v181
    %v191 = vld [vmem:[#allocation6] sm:$0xff]
    %v192 = vld [vmem:[#allocation6 + $0x8] sm:$0xff]
    %v193 = vld [vmem:[#allocation6 + $0x10] sm:$0xff]
    %v194 = vld [vmem:[#allocation6 + $0x18] sm:$0xff]
    %v195 = vld [vmem:[#allocation6 + $0x20] sm:$0xff]
    %v196 = vld [vmem:[#allocation6 + $0x28] sm:$0xff]
    %v197 = vld [vmem:[#allocation6 + $0x30] sm:$0xff]
    %v198 = vld [vmem:[#allocation6 + $0x38] sm:$0xff]
    %v199 = vld [vmem:[#allocation6 + $0x40] sm:$0xff]
    %v200 = vld [vmem:[#allocation6 + $0x48] sm:$0xff]
    %v201 = vld [vmem:[#allocation6 + $0x50] sm:$0xff]
    %v202 = vld [vmem:[#allocation6 + $0x58] sm:$0xff]
    %v203 = vld [vmem:[#allocation6 + $0x60] sm:$0xff]
    %v204 = vld [vmem:[#allocation6 + $0x68] sm:$0xff]
    %v205 = vld [vmem:[#allocation6 + $0x70] sm:$0xff]
    %v206 = vld [vmem:[#allocation6 + $0x78] sm:$0xff]
    %v207 = vld [vmem:[#allocation8] sm:$0xff]
    %v209 = vlaneseq
    %v210 = vshrl.u32 %v209, 7
    %v211 = vsub.s32 0, %v210
    %v212 = vrot.slane %v207, %v211
    %v213 = vlaneseq
    %v214 = vshrl.u32 %v213, 7
    %v215 = vsub.s32 1, %v214
    %v216 = vrot.slane %v207, %v215
    %v217 = vlaneseq
    %v218 = vshrl.u32 %v217, 7
    %v219 = vsub.s32 2, %v218
    %v220 = vrot.slane %v207, %v219
    %v221 = vlaneseq
    %v222 = vshrl.u32 %v221, 7
    %v223 = vsub.s32 3, %v222
    %v224 = vrot.slane %v207, %v223
    %v225 = vlaneseq
    %v226 = vshrl.u32 %v225, 7
    %v227 = vsub.s32 4, %v226
    %v228 = vrot.slane %v207, %v227
    %v229 = vlaneseq
    %v230 = vshrl.u32 %v229, 7
    %v231 = vsub.s32 5, %v230
    %v232 = vrot.slane %v207, %v231
    %v233 = vlaneseq
    %v234 = vshrl.u32 %v233, 7
    %v235 = vsub.s32 6, %v234
    %v236 = vrot.slane %v207, %v235
    %v237 = vlaneseq
    %v238 = vshrl.u32 %v237, 7
    %v239 = vsub.s32 7, %v238
    %v240 = vrot.slane %v207, %v239
    %v251 = vunpack.c.l.b16 %v189
    %v252 = vunpack.c.l.b16 %v190
    %v253 = vsel %vm184, %v252, %v251
    %v254 = vpack.c.b16 %v253, %v253
    %v271 = vunpack.c.l.b16 %v191
    %v272 = vunpack.c.h.b16 %v191
    %v273 = vunpack.c.l.b16 %v192
    %v274 = vunpack.c.h.b16 %v192
    %v275 = vunpack.c.l.b16 %v193
    %v276 = vunpack.c.h.b16 %v193
    %v277 = vunpack.c.l.b16 %v194
    %v278 = vunpack.c.h.b16 %v194
    %v279 = vunpack.c.l.b16 %v195
    %v280 = vunpack.c.h.b16 %v195
    %v281 = vunpack.c.l.b16 %v196
    %v282 = vunpack.c.h.b16 %v196
    %v283 = vunpack.c.l.b16 %v197
    %v284 = vunpack.c.h.b16 %v197
    %v285 = vunpack.c.l.b16 %v198
    %v286 = vunpack.c.h.b16 %v198
    %v287 = vunpack.c.l.b16 %v199
    %v288 = vunpack.c.h.b16 %v199
    %v289 = vunpack.c.l.b16 %v200
    %v290 = vunpack.c.h.b16 %v200
    %v291 = vunpack.c.l.b16 %v201
    %v292 = vunpack.c.h.b16 %v201
    %v293 = vunpack.c.l.b16 %v202
    %v294 = vunpack.c.h.b16 %v202
    %v295 = vunpack.c.l.b16 %v203
    %v296 = vunpack.c.h.b16 %v203
    %v297 = vunpack.c.l.b16 %v204
    %v298 = vunpack.c.h.b16 %v204
    %v299 = vunpack.c.l.b16 %v205
    %v300 = vunpack.c.h.b16 %v205
    %v301 = vunpack.c.l.b16 %v206
    %v302 = vunpack.c.h.b16 %v206
    %v303 = vpack.c.b16 %v279, %v271
    %v304 = vpack.c.b16 %v280, %v272
    %v305 = vpack.c.b16 %v281, %v273
    %v306 = vpack.c.b16 %v282, %v274
    %v307 = vpack.c.b16 %v283, %v275
    %v308 = vpack.c.b16 %v284, %v276
    %v309 = vpack.c.b16 %v285, %v277
    %v310 = vpack.c.b16 %v286, %v278
    %v311 = vpack.c.b16 %v295, %v287
    %v312 = vpack.c.b16 %v296, %v288
    %v313 = vpack.c.b16 %v297, %v289
    %v314 = vpack.c.b16 %v298, %v290
    %v315 = vpack.c.b16 %v299, %v291
    %v316 = vpack.c.b16 %v300, %v292
    %v317 = vpack.c.b16 %v301, %v293
    %v318 = vpack.c.b16 %v302, %v294
    %v336 = vsel %vm99, %v254, 0
    %338 = vmatprep.subr.bf16.mxu0 0
    %339 = vmatpush1.bf16.msra.mxu0 0
    %340 = vmatprep.subr.bf16.mxu0 0
    %341 = vmatpush1.bf16.msra.mxu0 0
    %342 = vmatprep.subr.bf16.mxu0 0
    %343 = vmatpush1.bf16.msra.mxu0 0
    %344 = vmatprep.subr.bf16.mxu0 0
    %345 = vmatpush1.bf16.msra.mxu0 0
    %346 = vmatprep.subr.bf16.mxu0 0
    %347 = vmatpush1.bf16.msra.mxu0 0
    %348 = vmatprep.subr.bf16.mxu0 0
    %349 = vmatpush1.bf16.msra.mxu0 0
    %350 = vmatprep.subr.bf16.mxu0 %v312
    %351 = vmatpush1.bf16.msra.mxu0 %v311
    %352 = vmatprep.subr.bf16.mxu0 %v304
    %353 = vmatpush1.bf16.msra.mxu0 %v303
    %354 = vmatprep.subr.bf16.mxu0 0
    %355 = vmatpush2.bf16.msra.mxu0 0
    %356 = vmatprep.subr.bf16.mxu0 0
    %357 = vmatpush2.bf16.msra.mxu0 0
    %358 = vmatprep.subr.bf16.mxu0 0
    %359 = vmatpush2.bf16.msra.mxu0 0
    %360 = vmatprep.subr.bf16.mxu0 0
    %361 = vmatpush2.bf16.msra.mxu0 0
    %362 = vmatprep.subr.bf16.mxu0 0
    %363 = vmatpush2.bf16.msra.mxu0 0
    %364 = vmatprep.subr.bf16.mxu0 0
    %365 = vmatpush2.bf16.msra.mxu0 0
    %366 = vmatprep.subr.bf16.mxu0 0
    %367 = vmatpush2.bf16.msra.mxu0 0
    %368 = vmatprep.subr.bf16.mxu0 0
    %369 = vmatpush2.bf16.msra.mxu0 0
    %370 = vmatprep.mubr.bf16.mxu0 0
    %371 = vmatmul.mubr.bf16.gmra.mxu0 %v336
    %v372 = vpop.f32.mrf.mxu0
    %v373 = vadd.f32 %v212, %v372
    %v374 = vpop.f32.mrf.mxu0
    %v375 = vadd.f32 %v216, %v374
    %v376 = vpop.f32.mrf.mxu0
    %v377 = vpop.f32.mrf.mxu0
    %378 = vdwg.mxu0
    %379 = vmatprep.subr.bf16.mxu0 0
    %380 = vmatpush1.bf16.msra.mxu0 0
    %381 = vmatprep.subr.bf16.mxu0 0
    %382 = vmatpush1.bf16.msra.mxu0 0
    %383 = vmatprep.subr.bf16.mxu0 0
    %384 = vmatpush1.bf16.msra.mxu0 0
    %385 = vmatprep.subr.bf16.mxu0 0
    %386 = vmatpush1.bf16.msra.mxu0 0
    %387 = vmatprep.subr.bf16.mxu0 0
    %388 = vmatpush1.bf16.msra.mxu0 0
    %389 = vmatprep.subr.bf16.mxu0 0
    %390 = vmatpush1.bf16.msra.mxu0 0
    %391 = vmatprep.subr.bf16.mxu0 %v314
    %392 = vmatpush1.bf16.msra.mxu0 %v313
    %393 = vmatprep.subr.bf16.mxu0 %v306
    %394 = vmatpush1.bf16.msra.mxu0 %v305
    %395 = vmatprep.subr.bf16.mxu0 0
    %396 = vmatpush2.bf16.msra.mxu0 0
    %397 = vmatprep.subr.bf16.mxu0 0
    %398 = vmatpush2.bf16.msra.mxu0 0
    %399 = vmatprep.subr.bf16.mxu0 0
    %400 = vmatpush2.bf16.msra.mxu0 0
    %401 = vmatprep.subr.bf16.mxu0 0
    %402 = vmatpush2.bf16.msra.mxu0 0
    %403 = vmatprep.subr.bf16.mxu0 0
    %404 = vmatpush2.bf16.msra.mxu0 0
    %405 = vmatprep.subr.bf16.mxu0 0
    %406 = vmatpush2.bf16.msra.mxu0 0
    %407 = vmatprep.subr.bf16.mxu0 0
    %408 = vmatpush2.bf16.msra.mxu0 0
    %409 = vmatprep.subr.bf16.mxu0 0
    %410 = vmatpush2.bf16.msra.mxu0 0
    %411 = vmatprep.mubr.bf16.mxu0 0
    %412 = vmatmul.mubr.bf16.gmra.mxu0 %v336
    %v413 = vpop.f32.mrf.mxu0
    %v414 = vadd.f32 %v220, %v413
    %v415 = vpop.f32.mrf.mxu0
    %v416 = vadd.f32 %v224, %v415
    %v417 = vpop.f32.mrf.mxu0
    %v418 = vpop.f32.mrf.mxu0
    %419 = vdwg.mxu0
    %420 = vmatprep.subr.bf16.mxu0 0
    %421 = vmatpush1.bf16.msra.mxu0 0
    %422 = vmatprep.subr.bf16.mxu0 0
    %423 = vmatpush1.bf16.msra.mxu0 0
    %424 = vmatprep.subr.bf16.mxu0 0
    %425 = vmatpush1.bf16.msra.mxu0 0
    %426 = vmatprep.subr.bf16.mxu0 0
    %427 = vmatpush1.bf16.msra.mxu0 0
    %428 = vmatprep.subr.bf16.mxu0 0
    %429 = vmatpush1.bf16.msra.mxu0 0
    %430 = vmatprep.subr.bf16.mxu0 0
    %431 = vmatpush1.bf16.msra.mxu0 0
    %432 = vmatprep.subr.bf16.mxu0 %v316
    %433 = vmatpush1.bf16.msra.mxu0 %v315
    %434 = vmatprep.subr.bf16.mxu0 %v308
    %435 = vmatpush1.bf16.msra.mxu0 %v307
    %436 = vmatprep.subr.bf16.mxu0 0
    %437 = vmatpush2.bf16.msra.mxu0 0
    %438 = vmatprep.subr.bf16.mxu0 0
    %439 = vmatpush2.bf16.msra.mxu0 0
    %440 = vmatprep.subr.bf16.mxu0 0
    %441 = vmatpush2.bf16.msra.mxu0 0
    %442 = vmatprep.subr.bf16.mxu0 0
    %443 = vmatpush2.bf16.msra.mxu0 0
    %444 = vmatprep.subr.bf16.mxu0 0
    %445 = vmatpush2.bf16.msra.mxu0 0
    %446 = vmatprep.subr.bf16.mxu0 0
    %447 = vmatpush2.bf16.msra.mxu0 0
    %448 = vmatprep.subr.bf16.mxu0 0
    %449 = vmatpush2.bf16.msra.mxu0 0
    %450 = vmatprep.subr.bf16.mxu0 0
    %451 = vmatpush2.bf16.msra.mxu0 0
    %452 = vmatprep.mubr.bf16.mxu0 0
    %453 = vmatmul.mubr.bf16.gmra.mxu0 %v336
    %v454 = vpop.f32.mrf.mxu0
    %v455 = vadd.f32 %v228, %v454
    %v456 = vpop.f32.mrf.mxu0
    %v457 = vadd.f32 %v232, %v456
    %v458 = vpop.f32.mrf.mxu0
    %v459 = vpop.f32.mrf.mxu0
    %460 = vdwg.mxu0
    %461 = vmatprep.subr.bf16.mxu0 0
    %462 = vmatpush1.bf16.msra.mxu0 0
    %463 = vmatprep.subr.bf16.mxu0 0
    %464 = vmatpush1.bf16.msra.mxu0 0
    %465 = vmatprep.subr.bf16.mxu0 0
    %466 = vmatpush1.bf16.msra.mxu0 0
    %467 = vmatprep.subr.bf16.mxu0 0
    %468 = vmatpush1.bf16.msra.mxu0 0
    %469 = vmatprep.subr.bf16.mxu0 0
    %470 = vmatpush1.bf16.msra.mxu0 0
    %471 = vmatprep.subr.bf16.mxu0 0
    %472 = vmatpush1.bf16.msra.mxu0 0
    %473 = vmatprep.subr.bf16.mxu0 %v318
    %474 = vmatpush1.bf16.msra.mxu0 %v317
    %475 = vmatprep.subr.bf16.mxu0 %v310
    %476 = vmatpush1.bf16.msra.mxu0 %v309
    %477 = vmatprep.subr.bf16.mxu0 0
    %478 = vmatpush2.bf16.msra.mxu0 0
    %479 = vmatprep.subr.bf16.mxu0 0
    %480 = vmatpush2.bf16.msra.mxu0 0
    %481 = vmatprep.subr.bf16.mxu0 0
    %482 = vmatpush2.bf16.msra.mxu0 0
    %483 = vmatprep.subr.bf16.mxu0 0
    %484 = vmatpush2.bf16.msra.mxu0 0
    %485 = vmatprep.subr.bf16.mxu0 0
    %486 = vmatpush2.bf16.msra.mxu0 0
    %487 = vmatprep.subr.bf16.mxu0 0
    %488 = vmatpush2.bf16.msra.mxu0 0
    %489 = vmatprep.subr.bf16.mxu0 0
    %490 = vmatpush2.bf16.msra.mxu0 0
    %491 = vmatprep.subr.bf16.mxu0 0
    %492 = vmatpush2.bf16.msra.mxu0 0
    %493 = vmatprep.mubr.bf16.mxu0 0
    %494 = vmatmul.mubr.bf16.gmra.mxu0 %v336
    %v495 = vpop.f32.mrf.mxu0
    %v496 = vadd.f32 %v236, %v495
    %v497 = vpop.f32.mrf.mxu0
    %v498 = vadd.f32 %v240, %v497
    %v499 = vpop.f32.mrf.mxu0
    %v500 = vpop.f32.mrf.mxu0
    %501 = vdwg.mxu0
    %v502 = vmax.f32 %v373, 0.0
    %v503 = vmax.f32 %v375, 0.0
    %v504 = vmax.f32 %v414, 0.0
    %v505 = vmax.f32 %v416, 0.0
    %v506 = vmax.f32 %v455, 0.0
    %v507 = vmax.f32 %v457, 0.0
    %v508 = vmax.f32 %v496, 0.0
    %v509 = vmax.f32 %v498, 0.0
    %v510 = vpack.c.bf16 %v502, %v502
    %v511 = vpack.c.bf16 %v503, %v503
    %v512 = vpack.c.bf16 %v504, %v504
    %v513 = vpack.c.bf16 %v505, %v505
    %v514 = vpack.c.bf16 %v506, %v506
    %v515 = vpack.c.bf16 %v507, %v507
    %v516 = vpack.c.bf16 %v508, %v508
    %v517 = vpack.c.bf16 %v509, %v509
    %v518 = vld [vmem:[#allocation9] sm:$0xf]
    %v519 = vld [vmem:[#allocation9 + $0x4] sm:$0xf]
    %v520 = vld [vmem:[#allocation9 + $0x8] sm:$0xf]
    %v521 = vld [vmem:[#allocation9 + $0xc] sm:$0xf]
    %v522 = vld [vmem:[#allocation9 + $0x10] sm:$0xf]
    %v523 = vld [vmem:[#allocation9 + $0x14] sm:$0xf]
    %v524 = vld [vmem:[#allocation9 + $0x18] sm:$0xf]
    %v525 = vld [vmem:[#allocation9 + $0x1c] sm:$0xf]
    %v526 = vld [vmem:[#allocation9 + $0x20] sm:$0xf]
    %v527 = vld [vmem:[#allocation9 + $0x24] sm:$0xf]
    %v528 = vld [vmem:[#allocation9 + $0x28] sm:$0xf]
    %v529 = vld [vmem:[#allocation9 + $0x2c] sm:$0xf]
    %v530 = vld [vmem:[#allocation9 + $0x30] sm:$0xf]
    %v531 = vld [vmem:[#allocation9 + $0x34] sm:$0xf]
    %v532 = vld [vmem:[#allocation9 + $0x38] sm:$0xf]
    %v533 = vld [vmem:[#allocation9 + $0x3c] sm:$0xf]
    %v534 = vld [vmem:[#allocation9 + $0x40] sm:$0xf]
    %v535 = vld [vmem:[#allocation9 + $0x44] sm:$0xf]
    %v536 = vld [vmem:[#allocation9 + $0x48] sm:$0xf]
    %v537 = vld [vmem:[#allocation9 + $0x4c] sm:$0xf]
    %v538 = vld [vmem:[#allocation9 + $0x50] sm:$0xf]
    %v539 = vld [vmem:[#allocation9 + $0x54] sm:$0xf]
    %v540 = vld [vmem:[#allocation9 + $0x58] sm:$0xf]
    %v541 = vld [vmem:[#allocation9 + $0x5c] sm:$0xf]
    %v542 = vld [vmem:[#allocation9 + $0x60] sm:$0xf]
    %v543 = vld [vmem:[#allocation9 + $0x64] sm:$0xf]
    %v544 = vld [vmem:[#allocation9 + $0x68] sm:$0xf]
    %v545 = vld [vmem:[#allocation9 + $0x6c] sm:$0xf]
    %v546 = vld [vmem:[#allocation9 + $0x70] sm:$0xf]
    %v547 = vld [vmem:[#allocation9 + $0x74] sm:$0xf]
    %v548 = vld [vmem:[#allocation9 + $0x78] sm:$0xf]
    %v549 = vld [vmem:[#allocation9 + $0x7c] sm:$0xf]
    %v550 = vld [vmem:[#allocation9 + $0x80] sm:$0xf]
    %v551 = vld [vmem:[#allocation9 + $0x84] sm:$0xf]
    %v552 = vld [vmem:[#allocation9 + $0x88] sm:$0xf]
    %v553 = vld [vmem:[#allocation9 + $0x8c] sm:$0xf]
    %v554 = vld [vmem:[#allocation9 + $0x90] sm:$0xf]
    %v555 = vld [vmem:[#allocation9 + $0x94] sm:$0xf]
    %v556 = vld [vmem:[#allocation9 + $0x98] sm:$0xf]
    %v557 = vld [vmem:[#allocation9 + $0x9c] sm:$0xf]
    %v558 = vld [vmem:[#allocation9 + $0xa0] sm:$0xf]
    %v559 = vld [vmem:[#allocation9 + $0xa4] sm:$0xf]
    %v560 = vld [vmem:[#allocation9 + $0xa8] sm:$0xf]
    %v561 = vld [vmem:[#allocation9 + $0xac] sm:$0xf]
    %v562 = vld [vmem:[#allocation9 + $0xb0] sm:$0xf]
    %v563 = vld [vmem:[#allocation9 + $0xb4] sm:$0xf]
    %v564 = vld [vmem:[#allocation9 + $0xb8] sm:$0xf]
    %v565 = vld [vmem:[#allocation9 + $0xbc] sm:$0xf]
    %v566 = vld [vmem:[#allocation9 + $0xc0] sm:$0xf]
    %v567 = vld [vmem:[#allocation9 + $0xc4] sm:$0xf]
    %v568 = vld [vmem:[#allocation9 + $0xc8] sm:$0xf]
    %v569 = vld [vmem:[#allocation9 + $0xcc] sm:$0xf]
    %v570 = vld [vmem:[#allocation9 + $0xd0] sm:$0xf]
    %v571 = vld [vmem:[#allocation9 + $0xd4] sm:$0xf]
    %v572 = vld [vmem:[#allocation9 + $0xd8] sm:$0xf]
    %v573 = vld [vmem:[#allocation9 + $0xdc] sm:$0xf]
    %v574 = vld [vmem:[#allocation9 + $0xe0] sm:$0xf]
    %v575 = vld [vmem:[#allocation9 + $0xe4] sm:$0xf]
    %v576 = vld [vmem:[#allocation9 + $0xe8] sm:$0xf]
    %v577 = vld [vmem:[#allocation9 + $0xec] sm:$0xf]
    %v578 = vld [vmem:[#allocation9 + $0xf0] sm:$0xf]
    %v579 = vld [vmem:[#allocation9 + $0xf4] sm:$0xf]
    %v580 = vld [vmem:[#allocation9 + $0xf8] sm:$0xf]
    %v581 = vld [vmem:[#allocation9 + $0xfc] sm:$0xf]
    %v582 = vld [vmem:[#allocation9 + $0x100] sm:$0xf]
    %v583 = vld [vmem:[#allocation9 + $0x104] sm:$0xf]
    %v584 = vld [vmem:[#allocation9 + $0x108] sm:$0xf]
    %v585 = vld [vmem:[#allocation9 + $0x10c] sm:$0xf]
    %v586 = vld [vmem:[#allocation9 + $0x110] sm:$0xf]
    %v587 = vld [vmem:[#allocation9 + $0x114] sm:$0xf]
    %v588 = vld [vmem:[#allocation9 + $0x118] sm:$0xf]
    %v589 = vld [vmem:[#allocation9 + $0x11c] sm:$0xf]
    %v590 = vld [vmem:[#allocation9 + $0x120] sm:$0xf]
    %v591 = vld [vmem:[#allocation9 + $0x124] sm:$0xf]
    %v592 = vld [vmem:[#allocation9 + $0x128] sm:$0xf]
    %v593 = vld [vmem:[#allocation9 + $0x12c] sm:$0xf]
    %v594 = vld [vmem:[#allocation9 + $0x130] sm:$0xf]
    %v595 = vld [vmem:[#allocation9 + $0x134] sm:$0xf]
    %v596 = vld [vmem:[#allocation9 + $0x138] sm:$0xf]
    %v597 = vld [vmem:[#allocation9 + $0x13c] sm:$0xf]
    %v598 = vld [vmem:[#allocation9 + $0x140] sm:$0xf]
    %v599 = vld [vmem:[#allocation9 + $0x144] sm:$0xf]
    %v600 = vld [vmem:[#allocation9 + $0x148] sm:$0xf]
    %v601 = vld [vmem:[#allocation9 + $0x14c] sm:$0xf]
    %v602 = vld [vmem:[#allocation9 + $0x150] sm:$0xf]
    %v603 = vld [vmem:[#allocation9 + $0x154] sm:$0xf]
    %v604 = vld [vmem:[#allocation9 + $0x158] sm:$0xf]
    %v605 = vld [vmem:[#allocation9 + $0x15c] sm:$0xf]
    %v606 = vld [vmem:[#allocation9 + $0x160] sm:$0xf]
    %v607 = vld [vmem:[#allocation9 + $0x164] sm:$0xf]
    %v608 = vld [vmem:[#allocation9 + $0x168] sm:$0xf]
    %v609 = vld [vmem:[#allocation9 + $0x16c] sm:$0xf]
    %v610 = vld [vmem:[#allocation9 + $0x170] sm:$0xf]
    %v611 = vld [vmem:[#allocation9 + $0x174] sm:$0xf]
    %v612 = vld [vmem:[#allocation9 + $0x178] sm:$0xf]
    %v613 = vld [vmem:[#allocation9 + $0x17c] sm:$0xf]
    %v614 = vld [vmem:[#allocation9 + $0x180] sm:$0xf]
    %v615 = vld [vmem:[#allocation9 + $0x184] sm:$0xf]
    %v616 = vld [vmem:[#allocation9 + $0x188] sm:$0xf]
    %v617 = vld [vmem:[#allocation9 + $0x18c] sm:$0xf]
    %v618 = vld [vmem:[#allocation9 + $0x190] sm:$0xf]
    %v619 = vld [vmem:[#allocation9 + $0x194] sm:$0xf]
    %v620 = vld [vmem:[#allocation9 + $0x198] sm:$0xf]
    %v621 = vld [vmem:[#allocation9 + $0x19c] sm:$0xf]
    %v622 = vld [vmem:[#allocation9 + $0x1a0] sm:$0xf]
    %v623 = vld [vmem:[#allocation9 + $0x1a4] sm:$0xf]
    %v624 = vld [vmem:[#allocation9 + $0x1a8] sm:$0xf]
    %v625 = vld [vmem:[#allocation9 + $0x1ac] sm:$0xf]
    %v626 = vld [vmem:[#allocation9 + $0x1b0] sm:$0xf]
    %v627 = vld [vmem:[#allocation9 + $0x1b4] sm:$0xf]
    %v628 = vld [vmem:[#allocation9 + $0x1b8] sm:$0xf]
    %v629 = vld [vmem:[#allocation9 + $0x1bc] sm:$0xf]
    %v630 = vld [vmem:[#allocation9 + $0x1c0] sm:$0xf]
    %v631 = vld [vmem:[#allocation9 + $0x1c4] sm:$0xf]
    %v632 = vld [vmem:[#allocation9 + $0x1c8] sm:$0xf]
    %v633 = vld [vmem:[#allocation9 + $0x1cc] sm:$0xf]
    %v634 = vld [vmem:[#allocation9 + $0x1d0] sm:$0xf]
    %v635 = vld [vmem:[#allocation9 + $0x1d4] sm:$0xf]
    %v636 = vld [vmem:[#allocation9 + $0x1d8] sm:$0xf]
    %v637 = vld [vmem:[#allocation9 + $0x1dc] sm:$0xf]
    %v638 = vld [vmem:[#allocation9 + $0x1e0] sm:$0xf]
    %v639 = vld [vmem:[#allocation9 + $0x1e4] sm:$0xf]
    %v640 = vld [vmem:[#allocation9 + $0x1e8] sm:$0xf]
    %v641 = vld [vmem:[#allocation9 + $0x1ec] sm:$0xf]
    %v642 = vld [vmem:[#allocation9 + $0x1f0] sm:$0xf]
    %v643 = vld [vmem:[#allocation9 + $0x1f4] sm:$0xf]
    %v644 = vld [vmem:[#allocation9 + $0x1f8] sm:$0xf]
    %v645 = vld [vmem:[#allocation9 + $0x1fc] sm:$0xf]
    %v646 = vld [vmem:[%s6] sm:$0x1]
    %v648 = vlaneseq
    %v649 = vshrl.u32 %v648, 7
    %v650 = vsub.s32 0, %v649
    %v651 = vrot.slane %v646, %v650
    %v781 = vunpack.c.l.b16 %v518
    %v782 = vunpack.c.l.b16 %v519
    %v783 = vunpack.c.l.b16 %v520
    %v784 = vunpack.c.l.b16 %v521
    %v785 = vunpack.c.l.b16 %v522
    %v786 = vunpack.c.l.b16 %v523
    %v787 = vunpack.c.l.b16 %v524
    %v788 = vunpack.c.l.b16 %v525
    %v789 = vunpack.c.l.b16 %v526
    %v790 = vunpack.c.l.b16 %v527
    %v791 = vunpack.c.l.b16 %v528
    %v792 = vunpack.c.l.b16 %v529
    %v793 = vunpack.c.l.b16 %v530
    %v794 = vunpack.c.l.b16 %v531
    %v795 = vunpack.c.l.b16 %v532
    %v796 = vunpack.c.l.b16 %v533
    %v797 = vunpack.c.l.b16 %v534
    %v798 = vunpack.c.l.b16 %v535
    %v799 = vunpack.c.l.b16 %v536
    %v800 = vunpack.c.l.b16 %v537
    %v801 = vunpack.c.l.b16 %v538
    %v802 = vunpack.c.l.b16 %v539
    %v803 = vunpack.c.l.b16 %v540
    %v804 = vunpack.c.l.b16 %v541
    %v805 = vunpack.c.l.b16 %v542
    %v806 = vunpack.c.l.b16 %v543
    %v807 = vunpack.c.l.b16 %v544
    %v808 = vunpack.c.l.b16 %v545
    %v809 = vunpack.c.l.b16 %v546
    %v810 = vunpack.c.l.b16 %v547
    %v811 = vunpack.c.l.b16 %v548
    %v812 = vunpack.c.l.b16 %v549
    %v813 = vunpack.c.l.b16 %v550
    %v814 = vunpack.c.l.b16 %v551
    %v815 = vunpack.c.l.b16 %v552
    %v816 = vunpack.c.l.b16 %v553
    %v817 = vunpack.c.l.b16 %v554
    %v818 = vunpack.c.l.b16 %v555
    %v819 = vunpack.c.l.b16 %v556
    %v820 = vunpack.c.l.b16 %v557
    %v821 = vunpack.c.l.b16 %v558
    %v822 = vunpack.c.l.b16 %v559
    %v823 = vunpack.c.l.b16 %v560
    %v824 = vunpack.c.l.b16 %v561
    %v825 = vunpack.c.l.b16 %v562
    %v826 = vunpack.c.l.b16 %v563
    %v827 = vunpack.c.l.b16 %v564
    %v828 = vunpack.c.l.b16 %v565
    %v829 = vunpack.c.l.b16 %v566
    %v830 = vunpack.c.l.b16 %v567
    %v831 = vunpack.c.l.b16 %v568
    %v832 = vunpack.c.l.b16 %v569
    %v833 = vunpack.c.l.b16 %v570
    %v834 = vunpack.c.l.b16 %v571
    %v835 = vunpack.c.l.b16 %v572
    %v836 = vunpack.c.l.b16 %v573
    %v837 = vunpack.c.l.b16 %v574
    %v838 = vunpack.c.l.b16 %v575
    %v839 = vunpack.c.l.b16 %v576
    %v840 = vunpack.c.l.b16 %v577
    %v841 = vunpack.c.l.b16 %v578
    %v842 = vunpack.c.l.b16 %v579
    %v843 = vunpack.c.l.b16 %v580
    %v844 = vunpack.c.l.b16 %v581
    %v845 = vunpack.c.l.b16 %v582
    %v846 = vunpack.c.l.b16 %v583
    %v847 = vunpack.c.l.b16 %v584
    %v848 = vunpack.c.l.b16 %v585
    %v849 = vunpack.c.l.b16 %v586
    %v850 = vunpack.c.l.b16 %v587
    %v851 = vunpack.c.l.b16 %v588
    %v852 = vunpack.c.l.b16 %v589
    %v853 = vunpack.c.l.b16 %v590
    %v854 = vunpack.c.l.b16 %v591
    %v855 = vunpack.c.l.b16 %v592
    %v856 = vunpack.c.l.b16 %v593
    %v857 = vunpack.c.l.b16 %v594
    %v858 = vunpack.c.l.b16 %v595
    %v859 = vunpack.c.l.b16 %v596
    %v860 = vunpack.c.l.b16 %v597
    %v861 = vunpack.c.l.b16 %v598
    %v862 = vunpack.c.l.b16 %v599
    %v863 = vunpack.c.l.b16 %v600
    %v864 = vunpack.c.l.b16 %v601
    %v865 = vunpack.c.l.b16 %v602
    %v866 = vunpack.c.l.b16 %v603
    %v867 = vunpack.c.l.b16 %v604
    %v868 = vunpack.c.l.b16 %v605
    %v869 = vunpack.c.l.b16 %v606
    %v870 = vunpack.c.l.b16 %v607
    %v871 = vunpack.c.l.b16 %v608
    %v872 = vunpack.c.l.b16 %v609
    %v873 = vunpack.c.l.b16 %v610
    %v874 = vunpack.c.l.b16 %v611
    %v875 = vunpack.c.l.b16 %v612
    %v876 = vunpack.c.l.b16 %v613
    %v877 = vunpack.c.l.b16 %v614
    %v878 = vunpack.c.l.b16 %v615
    %v879 = vunpack.c.l.b16 %v616
    %v880 = vunpack.c.l.b16 %v617
    %v881 = vunpack.c.l.b16 %v618
    %v882 = vunpack.c.l.b16 %v619
    %v883 = vunpack.c.l.b16 %v620
    %v884 = vunpack.c.l.b16 %v621
    %v885 = vunpack.c.l.b16 %v622
    %v886 = vunpack.c.l.b16 %v623
    %v887 = vunpack.c.l.b16 %v624
    %v888 = vunpack.c.l.b16 %v625
    %v889 = vunpack.c.l.b16 %v626
    %v890 = vunpack.c.l.b16 %v627
    %v891 = vunpack.c.l.b16 %v628
    %v892 = vunpack.c.l.b16 %v629
    %v893 = vunpack.c.l.b16 %v630
    %v894 = vunpack.c.l.b16 %v631
    %v895 = vunpack.c.l.b16 %v632
    %v896 = vunpack.c.l.b16 %v633
    %v897 = vunpack.c.l.b16 %v634
    %v898 = vunpack.c.l.b16 %v635
    %v899 = vunpack.c.l.b16 %v636
    %v900 = vunpack.c.l.b16 %v637
    %v901 = vunpack.c.l.b16 %v638
    %v902 = vunpack.c.l.b16 %v639
    %v903 = vunpack.c.l.b16 %v640
    %v904 = vunpack.c.l.b16 %v641
    %v905 = vunpack.c.l.b16 %v642
    %v906 = vunpack.c.l.b16 %v643
    %v907 = vunpack.c.l.b16 %v644
    %v908 = vunpack.c.l.b16 %v645
    %v909 = vpack.c.b16 %v782, %v781
    %v910 = vpack.c.b16 %v784, %v783
    %v911 = vpack.c.b16 %v786, %v785
    %v912 = vpack.c.b16 %v788, %v787
    %v913 = vpack.c.b16 %v790, %v789
    %v914 = vpack.c.b16 %v792, %v791
    %v915 = vpack.c.b16 %v794, %v793
    %v916 = vpack.c.b16 %v796, %v795
    %v917 = vpack.c.b16 %v798, %v797
    %v918 = vpack.c.b16 %v800, %v799
    %v919 = vpack.c.b16 %v802, %v801
    %v920 = vpack.c.b16 %v804, %v803
    %v921 = vpack.c.b16 %v806, %v805
    %v922 = vpack.c.b16 %v808, %v807
    %v923 = vpack.c.b16 %v810, %v809
    %v924 = vpack.c.b16 %v812, %v811
    %v925 = vpack.c.b16 %v814, %v813
    %v926 = vpack.c.b16 %v816, %v815
    %v927 = vpack.c.b16 %v818, %v817
    %v928 = vpack.c.b16 %v820, %v819
    %v929 = vpack.c.b16 %v822, %v821
    %v930 = vpack.c.b16 %v824, %v823
    %v931 = vpack.c.b16 %v826, %v825
    %v932 = vpack.c.b16 %v828, %v827
    %v933 = vpack.c.b16 %v830, %v829
    %v934 = vpack.c.b16 %v832, %v831
    %v935 = vpack.c.b16 %v834, %v833
    %v936 = vpack.c.b16 %v836, %v835
    %v937 = vpack.c.b16 %v838, %v837
    %v938 = vpack.c.b16 %v840, %v839
    %v939 = vpack.c.b16 %v842, %v841
    %v940 = vpack.c.b16 %v844, %v843
    %v941 = vpack.c.b16 %v846, %v845
    %v942 = vpack.c.b16 %v848, %v847
    %v943 = vpack.c.b16 %v850, %v849
    %v944 = vpack.c.b16 %v852, %v851
    %v945 = vpack.c.b16 %v854, %v853
    %v946 = vpack.c.b16 %v856, %v855
    %v947 = vpack.c.b16 %v858, %v857
    %v948 = vpack.c.b16 %v860, %v859
    %v949 = vpack.c.b16 %v862, %v861
    %v950 = vpack.c.b16 %v864, %v863
    %v951 = vpack.c.b16 %v866, %v865
    %v952 = vpack.c.b16 %v868, %v867
    %v953 = vpack.c.b16 %v870, %v869
    %v954 = vpack.c.b16 %v872, %v871
    %v955 = vpack.c.b16 %v874, %v873
    %v956 = vpack.c.b16 %v876, %v875
    %v957 = vpack.c.b16 %v878, %v877
    %v958 = vpack.c.b16 %v880, %v879
    %v959 = vpack.c.b16 %v882, %v881
    %v960 = vpack.c.b16 %v884, %v883
    %v961 = vpack.c.b16 %v886, %v885
    %v962 = vpack.c.b16 %v888, %v887
    %v963 = vpack.c.b16 %v890, %v889
    %v964 = vpack.c.b16 %v892, %v891
    %v965 = vpack.c.b16 %v894, %v893
    %v966 = vpack.c.b16 %v896, %v895
    %v967 = vpack.c.b16 %v898, %v897
    %v968 = vpack.c.b16 %v900, %v899
    %v969 = vpack.c.b16 %v902, %v901
    %v970 = vpack.c.b16 %v904, %v903
    %v971 = vpack.c.b16 %v906, %v905
    %v972 = vpack.c.b16 %v908, %v907
    %1037 = vmatprep.subr.bf16.mxu0 0
    %1038 = vmatpush1.bf16.msra.mxu0 %v916
    %1039 = vmatprep.subr.bf16.mxu0 0
    %1040 = vmatpush1.bf16.msra.mxu0 %v915
    %1041 = vmatprep.subr.bf16.mxu0 0
    %1042 = vmatpush1.bf16.msra.mxu0 %v914
    %1043 = vmatprep.subr.bf16.mxu0 0
    %1044 = vmatpush1.bf16.msra.mxu0 %v913
    %1045 = vmatprep.subr.bf16.mxu0 0
    %1046 = vmatpush1.bf16.msra.mxu0 %v912
    %1047 = vmatprep.subr.bf16.mxu0 0
    %1048 = vmatpush1.bf16.msra.mxu0 %v911
    %1049 = vmatprep.subr.bf16.mxu0 0
    %1050 = vmatpush1.bf16.msra.mxu0 %v910
    %1051 = vmatprep.subr.bf16.mxu0 0
    %1052 = vmatpush1.bf16.msra.mxu0 %v909
    %1053 = vmatprep.subr.bf16.mxu0 0
    %1054 = vmatpush2.bf16.msra.mxu0 %v924
    %1055 = vmatprep.subr.bf16.mxu0 0
    %1056 = vmatpush2.bf16.msra.mxu0 %v923
    %1057 = vmatprep.subr.bf16.mxu0 0
    %1058 = vmatpush2.bf16.msra.mxu0 %v922
    %1059 = vmatprep.subr.bf16.mxu0 0
    %1060 = vmatpush2.bf16.msra.mxu0 %v921
    %1061 = vmatprep.subr.bf16.mxu0 0
    %1062 = vmatpush2.bf16.msra.mxu0 %v920
    %1063 = vmatprep.subr.bf16.mxu0 0
    %1064 = vmatpush2.bf16.msra.mxu0 %v919
    %1065 = vmatprep.subr.bf16.mxu0 0
    %1066 = vmatpush2.bf16.msra.mxu0 %v918
    %1067 = vmatprep.subr.bf16.mxu0 0
    %1068 = vmatpush2.bf16.msra.mxu0 %v917
    %1069 = vmatprep.mubr.bf16.mxu0 %v511
    %1070 = vmatmul.mubr.bf16.gmra.mxu0 %v510
    %v1071 = vpop.f32.mrf.mxu0
    %v1072 = vadd.f32 %v651, %v1071
    %v1073 = vpop.f32.mrf.mxu0
    %v1074 = vpop.f32.mrf.mxu0
    %v1075 = vpop.f32.mrf.mxu0
    %1076 = vdwg.mxu0
    %1077 = vmatprep.subr.bf16.mxu0 0
    %1078 = vmatpush1.bf16.msra.mxu0 %v932
    %1079 = vmatprep.subr.bf16.mxu0 0
    %1080 = vmatpush1.bf16.msra.mxu0 %v931
    %1081 = vmatprep.subr.bf16.mxu0 0
    %1082 = vmatpush1.bf16.msra.mxu0 %v930
    %1083 = vmatprep.subr.bf16.mxu0 0
    %1084 = vmatpush1.bf16.msra.mxu0 %v929
    %1085 = vmatprep.subr.bf16.mxu0 0
    %1086 = vmatpush1.bf16.msra.mxu0 %v928
    %1087 = vmatprep.subr.bf16.mxu0 0
    %1088 = vmatpush1.bf16.msra.mxu0 %v927
    %1089 = vmatprep.subr.bf16.mxu0 0
    %1090 = vmatpush1.bf16.msra.mxu0 %v926
    %1091 = vmatprep.subr.bf16.mxu0 0
    %1092 = vmatpush1.bf16.msra.mxu0 %v925
    %1093 = vmatprep.subr.bf16.mxu0 0
    %1094 = vmatpush2.bf16.msra.mxu0 %v940
    %1095 = vmatprep.subr.bf16.mxu0 0
    %1096 = vmatpush2.bf16.msra.mxu0 %v939
    %1097 = vmatprep.subr.bf16.mxu0 0
    %1098 = vmatpush2.bf16.msra.mxu0 %v938
    %1099 = vmatprep.subr.bf16.mxu0 0
    %1100 = vmatpush2.bf16.msra.mxu0 %v937
    %1101 = vmatprep.subr.bf16.mxu0 0
    %1102 = vmatpush2.bf16.msra.mxu0 %v936
    %1103 = vmatprep.subr.bf16.mxu0 0
    %1104 = vmatpush2.bf16.msra.mxu0 %v935
    %1105 = vmatprep.subr.bf16.mxu0 0
    %1106 = vmatpush2.bf16.msra.mxu0 %v934
    %1107 = vmatprep.subr.bf16.mxu0 0
    %1108 = vmatpush2.bf16.msra.mxu0 %v933
    %1109 = vmatprep.mubr.bf16.mxu0 %v513
    %1110 = vmatmul.mubr.bf16.gmra.mxu0 %v512
    %v1111 = vpop.f32.mrf.mxu0
    %v1112 = vadd.f32 %v1072, %v1111
    %v1113 = vpop.f32.mrf.mxu0
    %v1114 = vpop.f32.mrf.mxu0
    %v1115 = vpop.f32.mrf.mxu0
    %1116 = vdwg.mxu0
    %1117 = vmatprep.subr.bf16.mxu0 0
    %1118 = vmatpush1.bf16.msra.mxu0 %v948
    %1119 = vmatprep.subr.bf16.mxu0 0
    %1120 = vmatpush1.bf16.msra.mxu0 %v947
    %1121 = vmatprep.subr.bf16.mxu0 0
    %1122 = vmatpush1.bf16.msra.mxu0 %v946
    %1123 = vmatprep.subr.bf16.mxu0 0
    %1124 = vmatpush1.bf16.msra.mxu0 %v945
    %1125 = vmatprep.subr.bf16.mxu0 0
    %1126 = vmatpush1.bf16.msra.mxu0 %v944
    %1127 = vmatprep.subr.bf16.mxu0 0
    %1128 = vmatpush1.bf16.msra.mxu0 %v943
    %1129 = vmatprep.subr.bf16.mxu0 0
    %1130 = vmatpush1.bf16.msra.mxu0 %v942
    %1131 = vmatprep.subr.bf16.mxu0 0
    %1132 = vmatpush1.bf16.msra.mxu0 %v941
    %1133 = vmatprep.subr.bf16.mxu0 0
    %1134 = vmatpush2.bf16.msra.mxu0 %v956
    %1135 = vmatprep.subr.bf16.mxu0 0
    %1136 = vmatpush2.bf16.msra.mxu0 %v955
    %1137 = vmatprep.subr.bf16.mxu0 0
    %1138 = vmatpush2.bf16.msra.mxu0 %v954
    %1139 = vmatprep.subr.bf16.mxu0 0
    %1140 = vmatpush2.bf16.msra.mxu0 %v953
    %1141 = vmatprep.subr.bf16.mxu0 0
    %1142 = vmatpush2.bf16.msra.mxu0 %v952
    %1143 = vmatprep.subr.bf16.mxu0 0
    %1144 = vmatpush2.bf16.msra.mxu0 %v951
    %1145 = vmatprep.subr.bf16.mxu0 0
    %1146 = vmatpush2.bf16.msra.mxu0 %v950
    %1147 = vmatprep.subr.bf16.mxu0 0
    %1148 = vmatpush2.bf16.msra.mxu0 %v949
    %1149 = vmatprep.mubr.bf16.mxu0 %v515
    %1150 = vmatmul.mubr.bf16.gmra.mxu0 %v514
    %v1151 = vpop.f32.mrf.mxu0
    %v1152 = vadd.f32 %v1112, %v1151
    %v1153 = vpop.f32.mrf.mxu0
    %v1154 = vpop.f32.mrf.mxu0
    %v1155 = vpop.f32.mrf.mxu0
    %1156 = vdwg.mxu0
    %1157 = vmatprep.subr.bf16.mxu0 0
    %1158 = vmatpush1.bf16.msra.mxu0 %v964
    %1159 = vmatprep.subr.bf16.mxu0 0
    %1160 = vmatpush1.bf16.msra.mxu0 %v963
    %1161 = vmatprep.subr.bf16.mxu0 0
    %1162 = vmatpush1.bf16.msra.mxu0 %v962
    %1163 = vmatprep.subr.bf16.mxu0 0
    %1164 = vmatpush1.bf16.msra.mxu0 %v961
    %1165 = vmatprep.subr.bf16.mxu0 0
    %1166 = vmatpush1.bf16.msra.mxu0 %v960
    %1167 = vmatprep.subr.bf16.mxu0 0
    %1168 = vmatpush1.bf16.msra.mxu0 %v959
    %1169 = vmatprep.subr.bf16.mxu0 0
    %1170 = vmatpush1.bf16.msra.mxu0 %v958
    %1171 = vmatprep.subr.bf16.mxu0 0
    %1172 = vmatpush1.bf16.msra.mxu0 %v957
    %1173 = vmatprep.subr.bf16.mxu0 0
    %1174 = vmatpush2.bf16.msra.mxu0 %v972
    %1175 = vmatprep.subr.bf16.mxu0 0
    %1176 = vmatpush2.bf16.msra.mxu0 %v971
    %1177 = vmatprep.subr.bf16.mxu0 0
    %1178 = vmatpush2.bf16.msra.mxu0 %v970
    %1179 = vmatprep.subr.bf16.mxu0 0
    %1180 = vmatpush2.bf16.msra.mxu0 %v969
    %1181 = vmatprep.subr.bf16.mxu0 0
    %1182 = vmatpush2.bf16.msra.mxu0 %v968
    %1183 = vmatprep.subr.bf16.mxu0 0
    %1184 = vmatpush2.bf16.msra.mxu0 %v967
    %1185 = vmatprep.subr.bf16.mxu0 0
    %1186 = vmatpush2.bf16.msra.mxu0 %v966
    %1187 = vmatprep.subr.bf16.mxu0 0
    %1188 = vmatpush2.bf16.msra.mxu0 %v965
    %1189 = vmatprep.mubr.bf16.mxu0 %v517
    %1190 = vmatmul.mubr.bf16.gmra.mxu0 %v516
    %v1191 = vpop.f32.mrf.mxu0
    %v1192 = vadd.f32 %v1152, %v1191
    %v1193 = vpop.f32.mrf.mxu0
    %v1194 = vpop.f32.mrf.mxu0
    %v1195 = vpop.f32.mrf.mxu0
    %1196 = vdwg.mxu0
    %1197 = vst [vmem:[#allocation12] sm:$0x3] %v1192
    // Predicated region
    $region46: #{tpu_custom_call.1} parent=1 // pred_check
      _
    $region47: #{tpu_custom_call.1} parent=1 // pred_check_branch
      %1199 = sbr.rel (0) target = $region49
    $region48: #{tpu_custom_call.1} parent=1 // pred_region
      %s1201 = ssub.s32 32, 32
      %1202 = vsyncadd [#allocation5], %s1201
      %s1204 = sshll.u32 [#allocation11], 4
      %s1205 = int_to_ptr.vmem [resolvable:$true] %s1204
      %1207 = dma.vmem_to_hbm [thread:$0]  %s1205, 32, %s7, [#allocation5]
    $region49: #{tpu_custom_call.1} parent=1 // pred_fallthru
      _
    // Predicated region
    $region50: #{tpu_custom_call.1} parent=1 // pred_check
      _
    $region51: #{tpu_custom_call.1} parent=1 // pred_check_branch
      %1209 = sbr.rel (0) target = $region53
    $region52: #{tpu_custom_call.1} parent=1 // pred_region
      %s1211 = ssub.s32 32, 32
      %1212 = vsyncadd [#allocation13], %s1211
      %s1214 = sshll.u32 [#allocation12], 4
      %s1215 = int_to_ptr.vmem [resolvable:$true] %s1214
      %1217 = dma.vmem_to_hbm [thread:$0]  %s1215, 32, %s8, [#allocation13]
    $region53: #{tpu_custom_call.1} parent=1 // pred_fallthru
      _
    // Predicated region
    $region54: #{tpu_custom_call.1} parent=1 // pred_check
      _
    $region55: #{tpu_custom_call.1} parent=1 // pred_check_branch
      %1219 = sbr.rel (0) target = $region57
    $region56: #{tpu_custom_call.1} parent=1 // pred_region
      %1220 = dma.done [#allocation5], 32
    $region57: #{tpu_custom_call.1} parent=1 // pred_fallthru
      _
    // Predicated region
    $region58: #{tpu_custom_call.1} parent=1 // pred_check
      _
    $region59: #{tpu_custom_call.1} parent=1 // pred_check_branch
      %1222 = sbr.rel (0) target = $region61
    $region60: #{tpu_custom_call.1} parent=1 // pred_region
      %1223 = dma.done [#allocation13], 32
    $region61: #{tpu_custom_call.1} parent=1 // pred_fallthru
      _
    %1224 = vsyncpa [#allocation4], 1
    %1225 = vsyncpa [#allocation7], 1
    %1226 = vsyncpa [#allocation10], 1
    %1227 = vsyncpa [#allocation5], 1
    %1228 = vsyncpa [#allocation13], 1

</llo_original>
